<compile_context>
chip_gen: v6e
topology: v6e:2x2x1
jax: 0.10.0
libtpu: 0.0.40
codegen_flags: <defaults>
</compile_context>

<pallas_src>
import jax
import jax.numpy as jnp
from jax.experimental import pallas as pl
from jax.experimental.pallas import tpu as pltpu

LANES = 128            # vreg lane width: pad every matmul N-dim to a multiple of this
ROW_ALIGN = 16         # bf16 sublane tile height: weight segments start 16-row aligned
MAX_BATCH_TILE = 512   # rows per grid step; multiple of 16, VMEM-safe on v5e/v6e/v7x


def _round_up(n, m):
    return ((n + m - 1) // m) * m


def _make_mlp_kernel(f_pad, w_pad):
    """Build the kernel with static row offsets into the packed bf16 weight buffer."""
    o_w1 = 0
    o_w2 = f_pad            # f_pad is a multiple of 16 -> 16-row aligned
    o_w3 = f_pad + w_pad    # w_pad is a multiple of 128

    def kernel(x_ref, w_ref, b_ref, o_ref):
        # One unmasked full-tile f32 load for all three biases; static row
        # slices of the loaded value are vreg-level (no masked sublane loads).
        biases = b_ref[...]
        b1 = biases[0:1, :]
        b2 = biases[1:2, :]
        b3 = biases[2:3, :]

        # ---- fc1 + ReLU: (TB, f_pad) @ (f_pad, w_pad) ----
        x = x_ref[...].astype(jnp.bfloat16)                  # cast only for the MXU
        h1 = jnp.dot(x, w_ref[pl.ds(o_w1, f_pad), :],
                     preferred_element_type=jnp.float32)
        h1 = jnp.maximum(h1 + b1, 0.0)                       # bias/ReLU in f32 (v5e VPU)

        # ---- fc2 + ReLU: (TB, w_pad) @ (w_pad, w_pad), cols >= H2 are zero ----
        h2 = jnp.dot(h1.astype(jnp.bfloat16), w_ref[pl.ds(o_w2, w_pad), :],
                     preferred_element_type=jnp.float32)
        h2 = jnp.maximum(h2 + b2, 0.0)

        # ---- fc3 logits: (TB, w_pad) @ (w_pad, w_pad), padded rows/cols zero ----
        logits = jnp.dot(h2.astype(jnp.bfloat16), w_ref[pl.ds(o_w3, w_pad), :],
                         preferred_element_type=jnp.float32) + b3
        o_ref[...] = logits.astype(o_ref.dtype)              # lane-dense unmasked store

    return kernel


def pack_params(params):
    """Pack weights into one lane-dense (R, w_pad) bf16 buffer + (8, w_pad) f32 biases.

    Weight columns are zero-padded to w_pad (multiple of 128) lanes so every matmul
    output is a full unmasked 128-lane block; every weight segment starts on a
    16-row boundary (bf16 sublane tile) so in-kernel static slices are aligned.
    Returns (weights_bf16, biases_f32, f_pad, w_pad, num_classes).
    """
    w1, b1, w2, b2, w3, b3 = params
    F, H1 = w1.shape
    H2 = w2.shape[1]
    C = w3.shape[1]

    f_pad = _round_up(F, ROW_ALIGN)
    w_pad = max(_round_up(H1, LANES), _round_up(H2, LANES), _round_up(C, LANES))

    rows = f_pad + 2 * w_pad
    wbuf = jnp.zeros((rows, w_pad), jnp.float32)
    wbuf = wbuf.at[0:F, :H1].set(w1)
    wbuf = wbuf.at[f_pad:f_pad + H1, :H2].set(w2)
    wbuf = wbuf.at[f_pad + w_pad:f_pad + w_pad + H2, :C].set(w3)

    bbuf = jnp.zeros((8, w_pad), jnp.float32)
    bbuf = bbuf.at[0, :H1].set(b1.reshape(-1))
    bbuf = bbuf.at[1, :H2].set(b2.reshape(-1))
    bbuf = bbuf.at[2, :C].set(b3.reshape(-1))

    return wbuf.astype(jnp.bfloat16), bbuf, f_pad, w_pad, C


def simple_classifier_forward(x, packed_w, bias_buf, f_pad, w_pad, num_classes,
                              out_dtype=jnp.float32):
    """Forward pass; returns (B, num_classes) f32 logits (sliced, small/debug path).

    At very large batch: pass out_dtype=jnp.bfloat16 and consume the padded
    (B, w_pad) block directly in the downstream op (mask lanes >= num_classes)
    to halve the dominant HBM output stream and avoid the extra slice copy.
    """
    B, F = x.shape
    if f_pad > F:   # zero feature padding contributes nothing (padded W1 rows are zero)
        x = jnp.pad(x, ((0, 0), (0, f_pad - F)))

    # Batch tile: multiple of 16 (bf16 sublane), capped so double-buffered
    # x (TB x f_pad f32) + out (TB x w_pad f32) blocks stay tiny relative to
    # v7x's 64 MiB VMEM (and v5e/v6e's 128 MiB).
    tb = min(MAX_BATCH_TILE, _round_up(B, ROW_ALIGN))
    b_pad = _round_up(B, tb)
    if b_pad > B:
        x = jnp.pad(x, ((0, b_pad - B), (0, 0)))

    kernel = _make_mlp_kernel(f_pad, w_pad)
    w_rows = packed_w.shape[0]

    out_pad = pl.pallas_call(
        kernel,
        out_shape=jax.ShapeDtypeStruct((b_pad, w_pad), out_dtype),
        grid=(b_pad // tb,),
        in_specs=[
            pl.BlockSpec((tb, f_pad), lambda i: (i, 0)),       # batch-tiled activations
            pl.BlockSpec((w_rows, w_pad), lambda i: (0, 0)),   # weights: VMEM-resident
            pl.BlockSpec((8, w_pad), lambda i: (0, 0)),        # biases:  VMEM-resident
        ],
        out_specs=pl.BlockSpec((tb, w_pad), lambda i: (i, 0)),
        compiler_params=pltpu.CompilerParams(
            dimension_semantics=("parallel",)),                # both TCs on v7x
    )(x, packed_w, bias_buf)

    # Small/debug path only: slice back to real rows / classes.
    return out_pad[:B, :num_classes]


def init_params(key, num_features, num_classes, hidden_size=128):
    """PyTorch nn.Linear default init: U[-1/sqrt(fan_in), 1/sqrt(fan_in)]."""
    dims = [
        (num_features, hidden_size),
        (hidden_size, hidden_size // 2),
        (hidden_size // 2, num_classes),
    ]
    params = []
    for fan_in, fan_out in dims:
        key, kw, kb = jax.random.split(key, 3)
        bound = float(fan_in) ** -0.5
        w = jax.random.uniform(kw, (fan_in, fan_out), jnp.float32, -bound, bound)
        b = jax.random.uniform(kb, (fan_out,), jnp.float32, -bound, bound)
        params += [w, b]
    return tuple(params)


def reference_forward(x, params):
    """Same-math oracle: bf16 operands into every dot, f32 accumulation,
    f32 bias add / ReLU — matches the kernel's arithmetic."""
    w1, b1, w2, b2, w3, b3 = params

    def linear(a, w, b):
        return jnp.dot(a.astype(jnp.bfloat16), w.astype(jnp.bfloat16),
                       preferred_element_type=jnp.float32) + b

    h1 = jnp.maximum(linear(x, w1, b1), 0.0)
    h2 = jnp.maximum(linear(h1, w2, b2), 0.0)
    return linear(h2, w3, b3)


if __name__ == "__main__":
    num_features = 32
    num_classes = 28
    hidden_size = 128
    batch = 8

    key = jax.random.PRNGKey(0)
    key, kx = jax.random.split(key)
    x = jax.random.normal(kx, (batch, num_features), jnp.float32)
    params = init_params(key, num_features, num_classes, hidden_size)

    packed_w, bias_buf, f_pad, w_pad, n_cls = pack_params(params)

    out = simple_classifier_forward(x, packed_w, bias_buf, f_pad, w_pad, n_cls)
    out = jax.block_until_ready(out)

    ref = reference_forward(x, params)
    assert out.shape == (batch, num_classes), out.shape
    # Kernel and reference use identical math (bf16 MXU operands, f32 accumulate).
    assert jnp.allclose(out, ref, atol=1e-2, rtol=1e-2), float(jnp.max(jnp.abs(out - ref)))
    print("KERNEL_OK")
</pallas_src>

<mosaic_0001>
module attributes {stable_mosaic.version = 11 : i64} {
  func.func @kernel(%arg0: i32, %arg1: memref<16x32xf32, #tpu.memory_space<vmem>>, %arg2: memref<288x128xbf16, #tpu.memory_space<vmem>>, %arg3: memref<8x128xf32, #tpu.memory_space<vmem>>, %arg4: memref<16x128xf32, #tpu.memory_space<vmem>>) attributes {dimension_semantics = [#tpu.dimension_semantics<parallel>], iteration_bounds = array<i64: 1>, scalar_prefetch = 0 : i64, scratch_operands = 0 : i64, tpu.core_type = #tpu.core_type<tc>, window_params = [{transform_indices = @transform_0, window_bounds = array<i64: 16, 32>}, {pipeline_mode = #tpu.pipeline_mode<synchronous>, transform_indices = @transform_1, window_bounds = array<i64: 288, 128>}, {pipeline_mode = #tpu.pipeline_mode<synchronous>, transform_indices = @transform_2, window_bounds = array<i64: 8, 128>}, {transform_indices = @transform_3, window_bounds = array<i64: 16, 128>}]} {
    %c0 = arith.constant 0 : index
    %c0_0 = arith.constant 0 : index
    %0 = vector.load %arg3[%c0, %c0_0] : memref<8x128xf32, #tpu.memory_space<vmem>>, vector<8x128xf32>
    %1 = vector.extract_strided_slice %0 {offsets = [0, 0], sizes = [1, 128], strides = [1, 1]} : vector<8x128xf32> to vector<1x128xf32>
    %2 = vector.extract_strided_slice %0 {offsets = [1, 0], sizes = [1, 128], strides = [1, 1]} : vector<8x128xf32> to vector<1x128xf32>
    %3 = vector.extract_strided_slice %0 {offsets = [2, 0], sizes = [1, 128], strides = [1, 1]} : vector<8x128xf32> to vector<1x128xf32>
    %c0_1 = arith.constant 0 : index
    %c0_2 = arith.constant 0 : index
    %4 = vector.load %arg1[%c0_1, %c0_2] : memref<16x32xf32, #tpu.memory_space<vmem>>, vector<16x32xf32>
    %5 = arith.truncf %4 : vector<16x32xf32> to vector<16x32xbf16>
    %c0_3 = arith.constant 0 : index
    %c0_4 = arith.constant 0 : index
    %6 = vector.load %arg2[%c0_3, %c0_4] : memref<288x128xbf16, #tpu.memory_space<vmem>>, vector<32x128xbf16>
    %cst = arith.constant dense<0.000000e+00> : vector<16x128xf32>
    %7 = tpu.matmul %5, %6, %cst {dimension_numbers = #tpu.dot_dimension_numbers<[1], [0], [0], [1], [0, 0, 1, 1], [], []>} : vector<16x32xbf16>, vector<32x128xbf16>, vector<16x128xf32> -> vector<16x128xf32>
    %8 = vector.broadcast %1 : vector<1x128xf32> to vector<16x128xf32>
    %9 = arith.addf %7, %8 : vector<16x128xf32>
    %cst_5 = arith.constant 0.000000e+00 : f32
    %10 = vector.broadcast %cst_5 : f32 to vector<16x128xf32>
    %11 = arith.maximumf %9, %10 : vector<16x128xf32>
    %12 = arith.truncf %11 : vector<16x128xf32> to vector<16x128xbf16>
    %c32 = arith.constant 32 : index
    %c0_6 = arith.constant 0 : index
    %13 = vector.load %arg2[%c32, %c0_6] : memref<288x128xbf16, #tpu.memory_space<vmem>>, vector<128x128xbf16>
    %cst_7 = arith.constant dense<0.000000e+00> : vector<16x128xf32>
    %14 = tpu.matmul %12, %13, %cst_7 {dimension_numbers = #tpu.dot_dimension_numbers<[1], [0], [0], [1], [0, 0, 1, 1], [], []>} : vector<16x128xbf16>, vector<128x128xbf16>, vector<16x128xf32> -> vector<16x128xf32>
    %15 = vector.broadcast %2 : vector<1x128xf32> to vector<16x128xf32>
    %16 = arith.addf %14, %15 : vector<16x128xf32>
    %cst_8 = arith.constant 0.000000e+00 : f32
    %17 = vector.broadcast %cst_8 : f32 to vector<16x128xf32>
    %18 = arith.maximumf %16, %17 : vector<16x128xf32>
    %19 = arith.truncf %18 : vector<16x128xf32> to vector<16x128xbf16>
    %c160 = arith.constant 160 : index
    %c0_9 = arith.constant 0 : index
    %20 = vector.load %arg2[%c160, %c0_9] : memref<288x128xbf16, #tpu.memory_space<vmem>>, vector<128x128xbf16>
    %cst_10 = arith.constant dense<0.000000e+00> : vector<16x128xf32>
    %21 = tpu.matmul %19, %20, %cst_10 {dimension_numbers = #tpu.dot_dimension_numbers<[1], [0], [0], [1], [0, 0, 1, 1], [], []>} : vector<16x128xbf16>, vector<128x128xbf16>, vector<16x128xf32> -> vector<16x128xf32>
    %22 = vector.broadcast %3 : vector<1x128xf32> to vector<16x128xf32>
    %23 = arith.addf %21, %22 : vector<16x128xf32>
    %c0_11 = arith.constant 0 : index
    %c0_12 = arith.constant 0 : index
    %24 = vector.load %arg4[%c0_11, %c0_12] : memref<16x128xf32, #tpu.memory_space<vmem>>, vector<16x128xf32>
    tpu.vector_store %arg4[%c0_11, %c0_12], %23 {strides = array<i32>} : memref<16x128xf32, #tpu.memory_space<vmem>>, vector<16x128xf32>,
    return
  }
  func.func @transform_0(%arg0: i32) -> (i32, i32) {
    %c0_i32 = arith.constant 0 : i32
    %c0_i32_0 = arith.constant 0 : i32
    return %arg0, %c0_i32 : i32, i32
  }
  func.func @transform_1(%arg0: i32) -> (i32, i32) {
    %c0_i32 = arith.constant 0 : i32
    %c0_i32_0 = arith.constant 0 : i32
    %c0_i32_1 = arith.constant 0 : i32
    return %c0_i32, %c0_i32_0 : i32, i32
  }
  func.func @transform_2(%arg0: i32) -> (i32, i32) {
    %c0_i32 = arith.constant 0 : i32
    %c0_i32_0 = arith.constant 0 : i32
    %c0_i32_1 = arith.constant 0 : i32
    return %c0_i32, %c0_i32_0 : i32, i32
  }
  func.func @transform_3(%arg0: i32) -> (i32, i32) {
    %c0_i32 = arith.constant 0 : i32
    %c0_i32_0 = arith.constant 0 : i32
    return %arg0, %c0_i32 : i32, i32
  }
}

</mosaic_0001>

<llo_original>
// kernel: tpu_custom_call.1
$region0: #{tpu_custom_call.1}
  #allocation0 [shape = 'u32[]', space=smem, size = 0x4, offset = 0x4, fixed_abs, tag = 'smem constant byte address 0x4 - core index']
  #allocation1 [shape = 'u32[144,128]{1,0:T(1,128)}', space=vmem, size = 0x12000, scoped, tag = 'internal scratch']
  %s0 = inlined_call_operand.hbm [shape: f32[16,32], index: 0, kind: input, shape index: {}]
  %s1 = inlined_call_operand.hbm [shape: bf16[288,128], index: 1, kind: input, shape index: {}]
  %s2 = inlined_call_operand.hbm [shape: f32[8,128], index: 2, kind: input, shape index: {}]
  %s3 = inlined_call_operand.hbm [shape: f32[16,128], index: 3, kind: output, shape index: {}]
  %s4 = sld [smem:[#allocation0]]
  $region34: #{tpu_custom_call.1} parent=0
    _
  %s6 = ssub.s32 1, %s4
  %s7 = scalar_select 0, %s6, %s4
  $region1: #{tpu_custom_call.1} parent=0
    #allocation2 [shape = 'u8[8192]{0}', space=vmem, size = 0x2000, scoped, tag = 'input window, operand 0, single buffered']
    #allocation3 [shape = 's32[1]{0}', space=sflag, size = 0x4, scoped, tag = 'scoped memory for tpu_custom_call.1']
    #allocation4 [shape = 's32[1]{0}', space=sflag, size = 0x4, scoped, tag = 'scoped memory for tpu_custom_call.1']
    #allocation5 [shape = 'u8[73728]{0}', space=vmem, size = 0x12000, scoped, tag = 'input window, operand 1, single buffered']
    #allocation6 [shape = 's32[1]{0}', space=sflag, size = 0x4, scoped, tag = 'scoped memory for tpu_custom_call.1']
    #allocation7 [shape = 'u8[4096]{0}', space=vmem, size = 0x1000, scoped, tag = 'input window, operand 2, single buffered']
    #allocation8 [shape = 'u8[8192]{0}', space=vmem, size = 0x2000, scoped, tag = 'output window, operand 0, single buffered']
    %8 = vsyncpa [#allocation3], 0
    %9 = vsyncpa [#allocation6], 0
    %10 = vsyncpa [#allocation4], 0
    // Predicated region
    $region2: #{tpu_custom_call.1} parent=1 // pred_check
      _
    $region3: #{tpu_custom_call.1} parent=1 // pred_check_branch
      %12 = sbr.rel (0) target = $region5
    $region4: #{tpu_custom_call.1} parent=1 // pred_region
      %s14 = ssub.s32 256, 256
      %15 = vsyncadd [#allocation3], %s14
      %s16 = sshll.u32 [#allocation2], 4
      %s17 = int_to_ptr.vmem [resolvable:$true] %s16
      %22 = dma.hbm_to_vmem [thread:$0]  %s0, 256, %s17, [#allocation3], 128, 128, 8
    $region5: #{tpu_custom_call.1} parent=1 // pred_fallthru
      _
    // Predicated region
    $region6: #{tpu_custom_call.1} parent=1 // pred_check
      _
    $region7: #{tpu_custom_call.1} parent=1 // pred_check_branch
      %24 = sbr.rel (0) target = $region9
    $region8: #{tpu_custom_call.1} parent=1 // pred_region
      %s26 = ssub.s32 2304, 2304
      %27 = vsyncadd [#allocation6], %s26
      %s28 = sshll.u32 [#allocation5], 4
      %s29 = int_to_ptr.vmem [resolvable:$true] %s28
      %34 = dma.hbm_to_vmem [thread:$0]  %s1, 2304, %s29, [#allocation6], 64, 64, 4
    $region9: #{tpu_custom_call.1} parent=1 // pred_fallthru
      _
    // Predicated region
    $region10: #{tpu_custom_call.1} parent=1 // pred_check
      _
    $region11: #{tpu_custom_call.1} parent=1 // pred_check_branch
      %36 = sbr.rel (0) target = $region13
    $region12: #{tpu_custom_call.1} parent=1 // pred_region
      %s38 = ssub.s32 128, 128
      %39 = vsyncadd [#allocation6], %s38
      %s41 = sshll.u32 [#allocation7], 4
      %s42 = int_to_ptr.vmem [resolvable:$true] %s41
      %44 = dma.hbm_to_vmem [thread:$0]  %s2, 128, %s42, [#allocation6]
    $region13: #{tpu_custom_call.1} parent=1 // pred_fallthru
      _
    // Predicated region
    $region14: #{tpu_custom_call.1} parent=1 // pred_check
      _
    $region15: #{tpu_custom_call.1} parent=1 // pred_check_branch
      %46 = sbr.rel (0) target = $region17
    $region16: #{tpu_custom_call.1} parent=1 // pred_region
      %47 = dma.done [#allocation3], 256
    $region17: #{tpu_custom_call.1} parent=1 // pred_fallthru
      _
    // Predicated region
    $region18: #{tpu_custom_call.1} parent=1 // pred_check
      _
    $region19: #{tpu_custom_call.1} parent=1 // pred_check_branch
      %49 = sbr.rel (0) target = $region21
    $region20: #{tpu_custom_call.1} parent=1 // pred_region
      %50 = dma.done [#allocation6], 2304
    $region21: #{tpu_custom_call.1} parent=1 // pred_fallthru
      _
    // Predicated region
    $region22: #{tpu_custom_call.1} parent=1 // pred_check
      _
    $region23: #{tpu_custom_call.1} parent=1 // pred_check_branch
      %52 = sbr.rel (0) target = $region25
    $region24: #{tpu_custom_call.1} parent=1 // pred_region
      %53 = dma.done [#allocation6], 128
    $region25: #{tpu_custom_call.1} parent=1 // pred_fallthru
      _
    %v55 = vld [vmem:[#allocation7] sm:$0xff]
    %v56 = vld [vmem:[#allocation2] sm:$0xff]
    %v57 = vld [vmem:[#allocation2 + $0x8] sm:$0xff]
    %v58 = vpack.c.bf16 %v57, %v56
    %v59 = vld [vmem:[#allocation5] sm:$0xf]
    %v60 = vld [vmem:[#allocation5 + $0x4] sm:$0xf]
    %v61 = vld [vmem:[#allocation5 + $0x8] sm:$0xf]
    %v62 = vld [vmem:[#allocation5 + $0xc] sm:$0xf]
    %v63 = vlaneseq
    %v64 = vshrl.u32 %v63, 7
    %v65 = vsub.s32 0, %v64
    %v66 = vrot.slane %v55, %v65
    %v71 = vunpack.c.l.b16 %v59
    %v72 = vunpack.c.l.b16 %v60
    %v73 = vunpack.c.l.b16 %v61
    %v74 = vunpack.c.l.b16 %v62
    %v75 = vpack.c.b16 %v72, %v71
    %v76 = vpack.c.b16 %v74, %v73
    %vm79 = vcmask 261120
    %v81 = vsel %vm79, %v58, 0
    %83 = vmatprep.subr.bf16.mxu0 0
    %84 = vmatpush1.bf16.msra.mxu0 0
    %85 = vmatprep.subr.bf16.mxu0 0
    %86 = vmatpush1.bf16.msra.mxu0 0
    %87 = vmatprep.subr.bf16.mxu0 0
    %88 = vmatpush1.bf16.msra.mxu0 0
    %89 = vmatprep.subr.bf16.mxu0 0
    %90 = vmatpush1.bf16.msra.mxu0 0
    %91 = vmatprep.subr.bf16.mxu0 0
    %92 = vmatpush1.bf16.msra.mxu0 0
    %93 = vmatprep.subr.bf16.mxu0 0
    %94 = vmatpush1.bf16.msra.mxu0 0
    %95 = vmatprep.subr.bf16.mxu0 0
    %96 = vmatpush1.bf16.msra.mxu0 %v76
    %97 = vmatprep.subr.bf16.mxu0 0
    %98 = vmatpush1.bf16.msra.mxu0 %v75
    %99 = vmatprep.subr.bf16.mxu0 0
    %100 = vmatpush2.bf16.msra.mxu0 0
    %101 = vmatprep.subr.bf16.mxu0 0
    %102 = vmatpush2.bf16.msra.mxu0 0
    %103 = vmatprep.subr.bf16.mxu0 0
    %104 = vmatpush2.bf16.msra.mxu0 0
    %105 = vmatprep.subr.bf16.mxu0 0
    %106 = vmatpush2.bf16.msra.mxu0 0
    %107 = vmatprep.subr.bf16.mxu0 0
    %108 = vmatpush2.bf16.msra.mxu0 0
    %109 = vmatprep.subr.bf16.mxu0 0
    %110 = vmatpush2.bf16.msra.mxu0 0
    %111 = vmatprep.subr.bf16.mxu0 0
    %112 = vmatpush2.bf16.msra.mxu0 0
    %113 = vmatprep.subr.bf16.mxu0 0
    %114 = vmatpush2.bf16.msra.mxu0 0
    %115 = vmatprep.mubr.bf16.mxu0 0
    %116 = vmatmul.mubr.bf16.gmra.mxu0 %v81
    %v117 = vpop.f32.mrf.mxu0
    %v118 = vadd.f32 %v66, %v117
    %v119 = vpop.f32.mrf.mxu0
    %v120 = vpop.f32.mrf.mxu0
    %v121 = vadd.f32 %v66, %v120
    %v122 = vpop.f32.mrf.mxu0
    %123 = vdwg.mxu0
    %v124 = vmax.f32 %v118, 0.0
    %v125 = vmax.f32 %v121, 0.0
    %v126 = vpack.c.bf16 %v125, %v124
    %v127 = vld [vmem:[#allocation5 + $0x10] sm:$0xf]
    %v128 = vld [vmem:[#allocation5 + $0x14] sm:$0xf]
    %v129 = vld [vmem:[#allocation5 + $0x18] sm:$0xf]
    %v130 = vld [vmem:[#allocation5 + $0x1c] sm:$0xf]
    %v131 = vld [vmem:[#allocation5 + $0x20] sm:$0xf]
    %v132 = vld [vmem:[#allocation5 + $0x24] sm:$0xf]
    %v133 = vld [vmem:[#allocation5 + $0x28] sm:$0xf]
    %v134 = vld [vmem:[#allocation5 + $0x2c] sm:$0xf]
    %v135 = vld [vmem:[#allocation5 + $0x30] sm:$0xf]
    %v136 = vld [vmem:[#allocation5 + $0x34] sm:$0xf]
    %v137 = vld [vmem:[#allocation5 + $0x38] sm:$0xf]
    %v138 = vld [vmem:[#allocation5 + $0x3c] sm:$0xf]
    %v139 = vld [vmem:[#allocation5 + $0x40] sm:$0xf]
    %v140 = vld [vmem:[#allocation5 + $0x44] sm:$0xf]
    %v141 = vld [vmem:[#allocation5 + $0x48] sm:$0xf]
    %v142 = vld [vmem:[#allocation5 + $0x4c] sm:$0xf]
    %v143 = vlaneseq
    %v144 = vshrl.u32 %v143, 7
    %v145 = vsub.s32 1, %v144
    %v146 = vrot.slane %v55, %v145
    %v163 = vunpack.c.l.b16 %v127
    %v164 = vunpack.c.l.b16 %v128
    %v165 = vunpack.c.l.b16 %v129
    %v166 = vunpack.c.l.b16 %v130
    %v167 = vunpack.c.l.b16 %v131
    %v168 = vunpack.c.l.b16 %v132
    %v169 = vunpack.c.l.b16 %v133
    %v170 = vunpack.c.l.b16 %v134
    %v171 = vunpack.c.l.b16 %v135
    %v172 = vunpack.c.l.b16 %v136
    %v173 = vunpack.c.l.b16 %v137
    %v174 = vunpack.c.l.b16 %v138
    %v175 = vunpack.c.l.b16 %v139
    %v176 = vunpack.c.l.b16 %v140
    %v177 = vunpack.c.l.b16 %v141
    %v178 = vunpack.c.l.b16 %v142
    %v179 = vpack.c.b16 %v164, %v163
    %v180 = vpack.c.b16 %v166, %v165
    %v181 = vpack.c.b16 %v168, %v167
    %v182 = vpack.c.b16 %v170, %v169
    %v183 = vpack.c.b16 %v172, %v171
    %v184 = vpack.c.b16 %v174, %v173
    %v185 = vpack.c.b16 %v176, %v175
    %v186 = vpack.c.b16 %v178, %v177
    %195 = vmatprep.subr.bf16.mxu0 0
    %196 = vmatpush1.bf16.msra.mxu0 %v186
    %197 = vmatprep.subr.bf16.mxu0 0
    %198 = vmatpush1.bf16.msra.mxu0 %v185
    %199 = vmatprep.subr.bf16.mxu0 0
    %200 = vmatpush1.bf16.msra.mxu0 %v184
    %201 = vmatprep.subr.bf16.mxu0 0
    %202 = vmatpush1.bf16.msra.mxu0 %v183
    %203 = vmatprep.subr.bf16.mxu0 0
    %204 = vmatpush1.bf16.msra.mxu0 %v182
    %205 = vmatprep.subr.bf16.mxu0 0
    %206 = vmatpush1.bf16.msra.mxu0 %v181
    %207 = vmatprep.subr.bf16.mxu0 0
    %208 = vmatpush1.bf16.msra.mxu0 %v180
    %209 = vmatprep.subr.bf16.mxu0 0
    %210 = vmatpush1.bf16.msra.mxu0 %v179
    %211 = vmatprep.subr.bf16.mxu0 0
    %212 = vmatpush2.bf16.msra.mxu0 0
    %213 = vmatprep.subr.bf16.mxu0 0
    %214 = vmatpush2.bf16.msra.mxu0 0
    %215 = vmatprep.subr.bf16.mxu0 0
    %216 = vmatpush2.bf16.msra.mxu0 0
    %217 = vmatprep.subr.bf16.mxu0 0
    %218 = vmatpush2.bf16.msra.mxu0 0
    %219 = vmatprep.subr.bf16.mxu0 0
    %220 = vmatpush2.bf16.msra.mxu0 0
    %221 = vmatprep.subr.bf16.mxu0 0
    %222 = vmatpush2.bf16.msra.mxu0 0
    %223 = vmatprep.subr.bf16.mxu0 0
    %224 = vmatpush2.bf16.msra.mxu0 0
    %225 = vmatprep.subr.bf16.mxu0 0
    %226 = vmatpush2.bf16.msra.mxu0 0
    %227 = vmatprep.mubr.bf16.mxu0 0
    %228 = vmatmul.mubr.bf16.gmra.mxu0 %v126
    %v229 = vpop.f32.mrf.mxu0
    %v230 = vadd.f32 %v146, %v229
    %v231 = vpop.f32.mrf.mxu0
    %v232 = vpop.f32.mrf.mxu0
    %v233 = vadd.f32 %v146, %v232
    %v234 = vpop.f32.mrf.mxu0
    %235 = vdwg.mxu0
    %v236 = vmax.f32 %v230, 0.0
    %v237 = vmax.f32 %v233, 0.0
    %v238 = vpack.c.bf16 %v237, %v236
    %v239 = vld [vmem:[#allocation5 + $0x50] sm:$0xf]
    %v240 = vld [vmem:[#allocation5 + $0x54] sm:$0xf]
    %v241 = vld [vmem:[#allocation5 + $0x58] sm:$0xf]
    %v242 = vld [vmem:[#allocation5 + $0x5c] sm:$0xf]
    %v243 = vld [vmem:[#allocation5 + $0x60] sm:$0xf]
    %v244 = vld [vmem:[#allocation5 + $0x64] sm:$0xf]
    %v245 = vld [vmem:[#allocation5 + $0x68] sm:$0xf]
    %v246 = vld [vmem:[#allocation5 + $0x6c] sm:$0xf]
    %v247 = vld [vmem:[#allocation5 + $0x70] sm:$0xf]
    %v248 = vld [vmem:[#allocation5 + $0x74] sm:$0xf]
    %v249 = vld [vmem:[#allocation5 + $0x78] sm:$0xf]
    %v250 = vld [vmem:[#allocation5 + $0x7c] sm:$0xf]
    %v251 = vld [vmem:[#allocation5 + $0x80] sm:$0xf]
    %v252 = vld [vmem:[#allocation5 + $0x84] sm:$0xf]
    %v253 = vld [vmem:[#allocation5 + $0x88] sm:$0xf]
    %v254 = vld [vmem:[#allocation5 + $0x8c] sm:$0xf]
    %v255 = vlaneseq
    %v256 = vshrl.u32 %v255, 7
    %v257 = vsub.s32 2, %v256
    %v258 = vrot.slane %v55, %v257
    %v275 = vunpack.c.l.b16 %v239
    %v276 = vunpack.c.l.b16 %v240
    %v277 = vunpack.c.l.b16 %v241
    %v278 = vunpack.c.l.b16 %v242
    %v279 = vunpack.c.l.b16 %v243
    %v280 = vunpack.c.l.b16 %v244
    %v281 = vunpack.c.l.b16 %v245
    %v282 = vunpack.c.l.b16 %v246
    %v283 = vunpack.c.l.b16 %v247
    %v284 = vunpack.c.l.b16 %v248
    %v285 = vunpack.c.l.b16 %v249
    %v286 = vunpack.c.l.b16 %v250
    %v287 = vunpack.c.l.b16 %v251
    %v288 = vunpack.c.l.b16 %v252
    %v289 = vunpack.c.l.b16 %v253
    %v290 = vunpack.c.l.b16 %v254
    %v291 = vpack.c.b16 %v276, %v275
    %v292 = vpack.c.b16 %v278, %v277
    %v293 = vpack.c.b16 %v280, %v279
    %v294 = vpack.c.b16 %v282, %v281
    %v295 = vpack.c.b16 %v284, %v283
    %v296 = vpack.c.b16 %v286, %v285
    %v297 = vpack.c.b16 %v288, %v287
    %v298 = vpack.c.b16 %v290, %v289
    %307 = vmatprep.subr.bf16.mxu0 0
    %308 = vmatpush1.bf16.msra.mxu0 %v298
    %309 = vmatprep.subr.bf16.mxu0 0
    %310 = vmatpush1.bf16.msra.mxu0 %v297
    %311 = vmatprep.subr.bf16.mxu0 0
    %312 = vmatpush1.bf16.msra.mxu0 %v296
    %313 = vmatprep.subr.bf16.mxu0 0
    %314 = vmatpush1.bf16.msra.mxu0 %v295
    %315 = vmatprep.subr.bf16.mxu0 0
    %316 = vmatpush1.bf16.msra.mxu0 %v294
    %317 = vmatprep.subr.bf16.mxu0 0
    %318 = vmatpush1.bf16.msra.mxu0 %v293
    %319 = vmatprep.subr.bf16.mxu0 0
    %320 = vmatpush1.bf16.msra.mxu0 %v292
    %321 = vmatprep.subr.bf16.mxu0 0
    %322 = vmatpush1.bf16.msra.mxu0 %v291
    %323 = vmatprep.subr.bf16.mxu0 0
    %324 = vmatpush2.bf16.msra.mxu0 0
    %325 = vmatprep.subr.bf16.mxu0 0
    %326 = vmatpush2.bf16.msra.mxu0 0
    %327 = vmatprep.subr.bf16.mxu0 0
    %328 = vmatpush2.bf16.msra.mxu0 0
    %329 = vmatprep.subr.bf16.mxu0 0
    %330 = vmatpush2.bf16.msra.mxu0 0
    %331 = vmatprep.subr.bf16.mxu0 0
    %332 = vmatpush2.bf16.msra.mxu0 0
    %333 = vmatprep.subr.bf16.mxu0 0
    %334 = vmatpush2.bf16.msra.mxu0 0
    %335 = vmatprep.subr.bf16.mxu0 0
    %336 = vmatpush2.bf16.msra.mxu0 0
    %337 = vmatprep.subr.bf16.mxu0 0
    %338 = vmatpush2.bf16.msra.mxu0 0
    %339 = vmatprep.mubr.bf16.mxu0 0
    %340 = vmatmul.mubr.bf16.gmra.mxu0 %v238
    %v341 = vpop.f32.mrf.mxu0
    %v342 = vadd.f32 %v258, %v341
    %v343 = vpop.f32.mrf.mxu0
    %v344 = vpop.f32.mrf.mxu0
    %v345 = vadd.f32 %v258, %v344
    %v346 = vpop.f32.mrf.mxu0
    %347 = vdwg.mxu0
    %348 = vst [vmem:[#allocation8] sm:$0xff] %v342
    %349 = vst [vmem:[#allocation8 + $0x8] sm:$0xff] %v345
    // Predicated region
    $region26: #{tpu_custom_call.1} parent=1 // pred_check
      _
    $region27: #{tpu_custom_call.1} parent=1 // pred_check_branch
      %351 = sbr.rel (0) target = $region29
    $region28: #{tpu_custom_call.1} parent=1 // pred_region
      %s353 = ssub.s32 256, 256
      %354 = vsyncadd [#allocation4], %s353
      %s355 = sshll.u32 [#allocation8], 4
      %s356 = int_to_ptr.vmem [resolvable:$true] %s355
      %361 = dma.vmem_to_hbm [thread:$0]  %s356, 256, %s3, [#allocation4], 128, 128, 8
    $region29: #{tpu_custom_call.1} parent=1 // pred_fallthru
      _
    // Predicated region
    $region30: #{tpu_custom_call.1} parent=1 // pred_check
      _
    $region31: #{tpu_custom_call.1} parent=1 // pred_check_branch
      %363 = sbr.rel (0) target = $region33
    $region32: #{tpu_custom_call.1} parent=1 // pred_region
      %364 = dma.done [#allocation4], 256
    $region33: #{tpu_custom_call.1} parent=1 // pred_fallthru
      _
    %365 = vsyncpa [#allocation3], 1
    %366 = vsyncpa [#allocation6], 1
    %367 = vsyncpa [#allocation4], 1

</llo_original>
